<compile_context>
chip_gen: v7x
topology: tpu7x:2x2x1
jax: 0.10.0
libtpu: 0.0.40
codegen_flags: <defaults>
</compile_context>

<pallas_src>
import jax
import jax.numpy as jnp
from jax import lax
from jax.experimental import pallas as pl
from jax.experimental.pallas import tpu as pltpu


def hakes_forward_kernel(qp_ref, at_ref, b_ref, wc_ref, c2_ref, sel_ref,
                         loss_ref):
    qp = qp_ref[...]                  # (2B, d_in): rows [0,B)=query, [B,2B)=pos
    At = at_ref[...]                  # (d_in, d_out)   pre-transposed A
    bias = b_ref[...]                 # (1, d_out)

    B = qp.shape[0] // 2

    # ---- fused HakesPreTransform for query and pos: one matmul + one bias ----
    tqp = jnp.dot(qp, At, preferred_element_type=jnp.float32) + bias  # (2B, d_out)

    q, p = qp[:B], qp[B:]
    tq, tp = tqp[:B], tqp[B:]

    # ---- compute_score (ip): contract last dims, no materialized .T ----
    dn = (((1,), (1,)), ((), ()))
    origin = lax.dot_general(q, p, dn, preferred_element_type=jnp.float32)  # (B, B)
    vt = lax.dot_general(tq, tp, dn, preferred_element_type=jnp.float32)    # (B, B)

    # ---- kldiv_loss: KL(softmax(origin) || softmax(vt)), batchmean ----
    t_shift = origin - jnp.max(origin, axis=-1, keepdims=True)
    t_logsm = t_shift - jnp.log(jnp.sum(jnp.exp(t_shift), axis=-1, keepdims=True))
    t_sm = jnp.exp(t_logsm)                                   # softmax(target)
    s_shift = vt - jnp.max(vt, axis=-1, keepdims=True)
    s_logsm = s_shift - jnp.log(jnp.sum(jnp.exp(s_shift), axis=-1, keepdims=True))
    vt_loss = jnp.sum(t_sm * (t_logsm - s_logsm)) / B

    # ---- HakesPQ reconstruction MSE via min squared distance ----
    # min_k ||x_j - c_{j,k}||^2 = |x_j|^2 + min_k (|c_{j,k}|^2 - 2 x_j.c_{j,k})
    # All subspaces' cross terms come from one matmul against the block-diagonal
    # codebook matrix built in the wrapper.
    # TODO(synk): HakesPQ internals not shown; assumed hard nearest-codeword
    # (argmin L2) reconstruction per subspace.
    tp2 = tp * tp
    x2 = jnp.dot(tp2, sel_ref[...], preferred_element_type=jnp.float32)   # (B, M)
    cross = jnp.dot(tp, wc_ref[...], preferred_element_type=jnp.float32)  # (B, M*K)
    partial = c2_ref[...] - 2.0 * cross                                   # (B, M*K)

    M = sel_ref.shape[1]
    K = partial.shape[1] // M
    sq_err = jnp.zeros((), jnp.float32)
    for j in range(M):                                        # static, tiny
        min_dj = jnp.min(partial[:, j * K:(j + 1) * K], axis=-1, keepdims=True)
        sq_err = sq_err + jnp.sum(jnp.maximum(x2[:, j:j + 1] + min_dj, 0.0))
    pq_loss = sq_err / (tp.shape[0] * tp.shape[1])

    loss_ref[0] = vt_loss
    loss_ref[1] = pq_loss


def hakes_index_forward(query_data, pos_data, A, b, codebooks):
    """query_data: (B, d_in); pos_data: (B, 1, d_in); codebooks: (M, K, DS).

    Returns (vt_loss, pq_loss, ivf_loss)."""
    f32 = jnp.float32
    pos = jnp.squeeze(pos_data, axis=1)               # torch.squeeze(pos_data, 1)
    qp = jnp.concatenate([query_data, pos], axis=0)   # (2B, d_in) fused operand
    At = A.T                                          # (d_in, d_out) pre-transposed
    b2 = b.reshape(1, -1)

    M, K, DS = codebooks.shape
    # Block-diagonal cross-term matrix: Wc[m*DS + d, m*K + k] = codebooks[m, k, d]
    blocks = jnp.transpose(codebooks, (0, 2, 1)).astype(f32)             # (M, DS, K)
    Wc = jnp.einsum('mdk,mn->mdnk', blocks, jnp.eye(M, dtype=f32))
    Wc = Wc.reshape(M * DS, M * K)                                       # (d_out, M*K)
    c2 = jnp.sum(codebooks.astype(f32) ** 2, axis=-1).reshape(1, M * K)  # (1, M*K)
    sel = jnp.repeat(jnp.eye(M, dtype=f32), DS, axis=0)                  # (d_out, M)

    vmem = pl.BlockSpec(memory_space=pltpu.MemorySpace.VMEM)
    losses = pl.pallas_call(
        hakes_forward_kernel,
        out_shape=jax.ShapeDtypeStruct((2,), jnp.float32),
        in_specs=[vmem] * 6,
        out_specs=pl.BlockSpec(memory_space=pltpu.MemorySpace.SMEM),
    )(qp, At, b2, Wc, c2, sel)

    ivf_loss = jnp.zeros((), jnp.float32)             # IVF not used in forward
    return losses[0], losses[1], ivf_loss


def reference_forward(query_data, pos_data, A, b, codebooks):
    """Pure-JAX mirror of the PyTorch forward, for verification."""
    p = pos_data[:, 0, :]
    tq = query_data @ A.T + b
    tp = p @ A.T + b
    origin = query_data @ p.T
    vt = tq @ tp.T
    t_sm = jax.nn.softmax(origin, axis=-1)
    s_logsm = jax.nn.log_softmax(vt, axis=-1)
    vt_loss = jnp.sum(t_sm * (jnp.log(t_sm) - s_logsm)) / origin.shape[0]

    M, K, DS = codebooks.shape
    tpr = tp.reshape(tp.shape[0], M, DS)
    d = jnp.sum((tpr[:, :, None, :] - codebooks[None, :, :, :]) ** 2, axis=-1)  # (B,M,K)
    idx = jnp.argmin(d, axis=-1)                                                # (B,M)
    quant = codebooks[jnp.arange(M)[None, :], idx]                              # (B,M,DS)
    pq_loss = jnp.mean((tpr - quant) ** 2)
    return vt_loss, pq_loss, jnp.zeros((), jnp.float32)


if __name__ == "__main__":
    B, D_IN, D_OUT = 8, 32, 32
    M, NBITS = 4, 4
    K, DSUB = 2 ** NBITS, D_OUT // M

    key = jax.random.PRNGKey(0)
    kq, kp, ka, kb, kc = jax.random.split(key, 5)
    query_data = jax.random.normal(kq, (B, D_IN), dtype=jnp.float32)
    pos_data = jax.random.normal(kp, (B, 1, D_IN), dtype=jnp.float32)
    # deterministic parameter init (HakesVecTransform A/b, HakesPQ codebooks)
    A = jax.random.normal(ka, (D_OUT, D_IN), dtype=jnp.float32) / jnp.sqrt(D_IN)
    b = 0.01 * jax.random.normal(kb, (D_OUT,), dtype=jnp.float32)
    codebooks = jax.random.normal(kc, (M, K, DSUB), dtype=jnp.float32)

    vt_loss, pq_loss, ivf_loss = jax.jit(hakes_index_forward)(
        query_data, pos_data, A, b, codebooks)
    jax.block_until_ready((vt_loss, pq_loss, ivf_loss))

    ref_vt, ref_pq, ref_ivf = reference_forward(query_data, pos_data, A, b, codebooks)
    assert jnp.allclose(vt_loss, ref_vt, rtol=1e-4, atol=1e-5), (vt_loss, ref_vt)
    assert jnp.allclose(pq_loss, ref_pq, rtol=1e-4, atol=1e-5), (pq_loss, ref_pq)
    assert ivf_loss == ref_ivf

    print("KERNEL_OK")
</pallas_src>

<mosaic_0001>
module attributes {stable_mosaic.version = 11 : i64} {
  func.func @hakes_forward_kernel(%arg0: memref<16x32xf32, #tpu.memory_space<vmem>>, %arg1: memref<32x32xf32, #tpu.memory_space<vmem>>, %arg2: memref<1x32xf32, #tpu.memory_space<vmem>>, %arg3: memref<32x64xf32, #tpu.memory_space<vmem>>, %arg4: memref<1x64xf32, #tpu.memory_space<vmem>>, %arg5: memref<32x4xf32, #tpu.memory_space<vmem>>, %arg6: memref<2xf32, #tpu.memory_space<smem>>) attributes {dimension_semantics = [], scalar_prefetch = 0 : i64, scratch_operands = 0 : i64, tpu.core_type = #tpu.core_type<tc>} {
    %c0 = arith.constant 0 : index
    %c0_0 = arith.constant 0 : index
    %0 = vector.load %arg0[%c0, %c0_0] : memref<16x32xf32, #tpu.memory_space<vmem>>, vector<16x32xf32>
    %c0_1 = arith.constant 0 : index
    %c0_2 = arith.constant 0 : index
    %1 = vector.load %arg1[%c0_1, %c0_2] : memref<32x32xf32, #tpu.memory_space<vmem>>, vector<32x32xf32>
    %c0_3 = arith.constant 0 : index
    %c0_4 = arith.constant 0 : index
    %2 = vector.load %arg2[%c0_3, %c0_4] : memref<1x32xf32, #tpu.memory_space<vmem>>, vector<1x32xf32>
    %cst = arith.constant dense<0.000000e+00> : vector<16x32xf32>
    %3 = tpu.matmul %0, %1, %cst {dimension_numbers = #tpu.dot_dimension_numbers<[1], [0], [0], [1], [0, 0, 1, 1], [], []>} : vector<16x32xf32>, vector<32x32xf32>, vector<16x32xf32> -> vector<16x32xf32>
    %4 = vector.broadcast %2 : vector<1x32xf32> to vector<16x32xf32>
    %5 = arith.addf %3, %4 : vector<16x32xf32>
    %6 = vector.extract_strided_slice %0 {offsets = [0, 0], sizes = [8, 32], strides = [1, 1]} : vector<16x32xf32> to vector<8x32xf32>
    %7 = vector.extract_strided_slice %0 {offsets = [8, 0], sizes = [8, 32], strides = [1, 1]} : vector<16x32xf32> to vector<8x32xf32>
    %8 = vector.extract_strided_slice %5 {offsets = [0, 0], sizes = [8, 32], strides = [1, 1]} : vector<16x32xf32> to vector<8x32xf32>
    %9 = vector.extract_strided_slice %5 {offsets = [8, 0], sizes = [8, 32], strides = [1, 1]} : vector<16x32xf32> to vector<8x32xf32>
    %cst_5 = arith.constant dense<0.000000e+00> : vector<8x8xf32>
    %10 = tpu.matmul %6, %7, %cst_5 {dimension_numbers = #tpu.dot_dimension_numbers<[1], [1], [0], [0], [0, 0, 1, 0], [], []>} : vector<8x32xf32>, vector<8x32xf32>, vector<8x8xf32> -> vector<8x8xf32>
    %cst_6 = arith.constant dense<0.000000e+00> : vector<8x8xf32>
    %11 = tpu.matmul %8, %9, %cst_6 {dimension_numbers = #tpu.dot_dimension_numbers<[1], [1], [0], [0], [0, 0, 1, 0], [], []>} : vector<8x32xf32>, vector<8x32xf32>, vector<8x8xf32> -> vector<8x8xf32>
    %cst_7 = arith.constant dense<0xFF800000> : vector<8xf32>
    %12 = vector.multi_reduction <maximumf>, %10, %cst_7 [1] : vector<8x8xf32> to vector<8xf32>
    %13 = vector.shape_cast %12 : vector<8xf32> to vector<8x1xf32>
    %14 = vector.broadcast %13 : vector<8x1xf32> to vector<8x8xf32>
    %15 = arith.subf %10, %14 : vector<8x8xf32>
    %16 = math.exp %15 : vector<8x8xf32>
    %cst_8 = arith.constant dense<0.000000e+00> : vector<8xf32>
    %17 = vector.multi_reduction <add>, %16, %cst_8 [1] : vector<8x8xf32> to vector<8xf32>
    %18 = vector.shape_cast %17 : vector<8xf32> to vector<8x1xf32>
    %19 = math.log %18 : vector<8x1xf32>
    %20 = vector.broadcast %19 : vector<8x1xf32> to vector<8x8xf32>
    %21 = arith.subf %15, %20 : vector<8x8xf32>
    %22 = math.exp %21 : vector<8x8xf32>
    %cst_9 = arith.constant dense<0xFF800000> : vector<8xf32>
    %23 = vector.multi_reduction <maximumf>, %11, %cst_9 [1] : vector<8x8xf32> to vector<8xf32>
    %24 = vector.shape_cast %23 : vector<8xf32> to vector<8x1xf32>
    %25 = vector.broadcast %24 : vector<8x1xf32> to vector<8x8xf32>
    %26 = arith.subf %11, %25 : vector<8x8xf32>
    %27 = math.exp %26 : vector<8x8xf32>
    %cst_10 = arith.constant dense<0.000000e+00> : vector<8xf32>
    %28 = vector.multi_reduction <add>, %27, %cst_10 [1] : vector<8x8xf32> to vector<8xf32>
    %29 = vector.shape_cast %28 : vector<8xf32> to vector<8x1xf32>
    %30 = math.log %29 : vector<8x1xf32>
    %31 = vector.broadcast %30 : vector<8x1xf32> to vector<8x8xf32>
    %32 = arith.subf %26, %31 : vector<8x8xf32>
    %33 = arith.subf %21, %32 : vector<8x8xf32>
    %34 = arith.mulf %22, %33 : vector<8x8xf32>
    %35 = vector.shape_cast %34 : vector<8x8xf32> to vector<1x8x8xf32>
    %cst_11 = arith.constant dense<0.000000e+00> : vector<1xf32>
    %36 = vector.multi_reduction <add>, %35, %cst_11 [1, 2] : vector<1x8x8xf32> to vector<1xf32>
    %37 = vector.shape_cast %36 : vector<1xf32> to vector<1x1x1xf32>
    %38 = vector.extract %37[0, 0, 0] : f32 from vector<1x1x1xf32>
    %cst_12 = arith.constant 8.000000e+00 : f32
    %39 = arith.divf %38, %cst_12 : f32
    %40 = arith.mulf %9, %9 : vector<8x32xf32>
    %c0_13 = arith.constant 0 : index
    %c0_14 = arith.constant 0 : index
    %41 = vector.load %arg5[%c0_13, %c0_14] : memref<32x4xf32, #tpu.memory_space<vmem>>, vector<32x4xf32>
    %cst_15 = arith.constant dense<0.000000e+00> : vector<8x4xf32>
    %42 = tpu.matmul %40, %41, %cst_15 {dimension_numbers = #tpu.dot_dimension_numbers<[1], [0], [0], [1], [0, 0, 1, 1], [], []>} : vector<8x32xf32>, vector<32x4xf32>, vector<8x4xf32> -> vector<8x4xf32>
    %c0_16 = arith.constant 0 : index
    %c0_17 = arith.constant 0 : index
    %43 = vector.load %arg3[%c0_16, %c0_17] : memref<32x64xf32, #tpu.memory_space<vmem>>, vector<32x64xf32>
    %cst_18 = arith.constant dense<0.000000e+00> : vector<8x64xf32>
    %44 = tpu.matmul %9, %43, %cst_18 {dimension_numbers = #tpu.dot_dimension_numbers<[1], [0], [0], [1], [0, 0, 1, 1], [], []>} : vector<8x32xf32>, vector<32x64xf32>, vector<8x64xf32> -> vector<8x64xf32>
    %c0_19 = arith.constant 0 : index
    %c0_20 = arith.constant 0 : index
    %45 = vector.load %arg4[%c0_19, %c0_20] : memref<1x64xf32, #tpu.memory_space<vmem>>, vector<1x64xf32>
    %cst_21 = arith.constant 2.000000e+00 : f32
    %46 = vector.broadcast %cst_21 : f32 to vector<8x64xf32>
    %47 = arith.mulf %46, %44 : vector<8x64xf32>
    %48 = vector.broadcast %45 : vector<1x64xf32> to vector<8x64xf32>
    %49 = arith.subf %48, %47 : vector<8x64xf32>
    %50 = vector.extract_strided_slice %49 {offsets = [0, 0], sizes = [8, 16], strides = [1, 1]} : vector<8x64xf32> to vector<8x16xf32>
    %cst_22 = arith.constant dense<0x7F800000> : vector<8xf32>
    %51 = vector.multi_reduction <minimumf>, %50, %cst_22 [1] : vector<8x16xf32> to vector<8xf32>
    %52 = vector.shape_cast %51 : vector<8xf32> to vector<8x1xf32>
    %53 = vector.extract_strided_slice %42 {offsets = [0, 0], sizes = [8, 1], strides = [1, 1]} : vector<8x4xf32> to vector<8x1xf32>
    %54 = arith.addf %53, %52 : vector<8x1xf32>
    %cst_23 = arith.constant 0.000000e+00 : f32
    %55 = vector.broadcast %cst_23 : f32 to vector<8x1xf32>
    %56 = arith.maximumf %54, %55 : vector<8x1xf32>
    %57 = vector.shape_cast %56 : vector<8x1xf32> to vector<1x8x1xf32>
    %cst_24 = arith.constant dense<0.000000e+00> : vector<1xf32>
    %58 = vector.multi_reduction <add>, %57, %cst_24 [1, 2] : vector<1x8x1xf32> to vector<1xf32>
    %59 = vector.shape_cast %58 : vector<1xf32> to vector<1x1x1xf32>
    %60 = vector.extract %59[0, 0, 0] : f32 from vector<1x1x1xf32>
    %cst_25 = arith.constant 0.000000e+00 : f32
    %61 = arith.addf %cst_25, %60 : f32
    %62 = vector.extract_strided_slice %49 {offsets = [0, 16], sizes = [8, 16], strides = [1, 1]} : vector<8x64xf32> to vector<8x16xf32>
    %cst_26 = arith.constant dense<0x7F800000> : vector<8xf32>
    %63 = vector.multi_reduction <minimumf>, %62, %cst_26 [1] : vector<8x16xf32> to vector<8xf32>
    %64 = vector.shape_cast %63 : vector<8xf32> to vector<8x1xf32>
    %65 = vector.extract_strided_slice %42 {offsets = [0, 1], sizes = [8, 1], strides = [1, 1]} : vector<8x4xf32> to vector<8x1xf32>
    %66 = arith.addf %65, %64 : vector<8x1xf32>
    %cst_27 = arith.constant 0.000000e+00 : f32
    %67 = vector.broadcast %cst_27 : f32 to vector<8x1xf32>
    %68 = arith.maximumf %66, %67 : vector<8x1xf32>
    %69 = vector.shape_cast %68 : vector<8x1xf32> to vector<1x8x1xf32>
    %cst_28 = arith.constant dense<0.000000e+00> : vector<1xf32>
    %70 = vector.multi_reduction <add>, %69, %cst_28 [1, 2] : vector<1x8x1xf32> to vector<1xf32>
    %71 = vector.shape_cast %70 : vector<1xf32> to vector<1x1x1xf32>
    %72 = vector.extract %71[0, 0, 0] : f32 from vector<1x1x1xf32>
    %73 = arith.addf %61, %72 : f32
    %74 = vector.extract_strided_slice %49 {offsets = [0, 32], sizes = [8, 16], strides = [1, 1]} : vector<8x64xf32> to vector<8x16xf32>
    %cst_29 = arith.constant dense<0x7F800000> : vector<8xf32>
    %75 = vector.multi_reduction <minimumf>, %74, %cst_29 [1] : vector<8x16xf32> to vector<8xf32>
    %76 = vector.shape_cast %75 : vector<8xf32> to vector<8x1xf32>
    %77 = vector.extract_strided_slice %42 {offsets = [0, 2], sizes = [8, 1], strides = [1, 1]} : vector<8x4xf32> to vector<8x1xf32>
    %78 = arith.addf %77, %76 : vector<8x1xf32>
    %cst_30 = arith.constant 0.000000e+00 : f32
    %79 = vector.broadcast %cst_30 : f32 to vector<8x1xf32>
    %80 = arith.maximumf %78, %79 : vector<8x1xf32>
    %81 = vector.shape_cast %80 : vector<8x1xf32> to vector<1x8x1xf32>
    %cst_31 = arith.constant dense<0.000000e+00> : vector<1xf32>
    %82 = vector.multi_reduction <add>, %81, %cst_31 [1, 2] : vector<1x8x1xf32> to vector<1xf32>
    %83 = vector.shape_cast %82 : vector<1xf32> to vector<1x1x1xf32>
    %84 = vector.extract %83[0, 0, 0] : f32 from vector<1x1x1xf32>
    %85 = arith.addf %73, %84 : f32
    %86 = vector.extract_strided_slice %49 {offsets = [0, 48], sizes = [8, 16], strides = [1, 1]} : vector<8x64xf32> to vector<8x16xf32>
    %cst_32 = arith.constant dense<0x7F800000> : vector<8xf32>
    %87 = vector.multi_reduction <minimumf>, %86, %cst_32 [1] : vector<8x16xf32> to vector<8xf32>
    %88 = vector.shape_cast %87 : vector<8xf32> to vector<8x1xf32>
    %89 = vector.extract_strided_slice %42 {offsets = [0, 3], sizes = [8, 1], strides = [1, 1]} : vector<8x4xf32> to vector<8x1xf32>
    %90 = arith.addf %89, %88 : vector<8x1xf32>
    %cst_33 = arith.constant 0.000000e+00 : f32
    %91 = vector.broadcast %cst_33 : f32 to vector<8x1xf32>
    %92 = arith.maximumf %90, %91 : vector<8x1xf32>
    %93 = vector.shape_cast %92 : vector<8x1xf32> to vector<1x8x1xf32>
    %cst_34 = arith.constant dense<0.000000e+00> : vector<1xf32>
    %94 = vector.multi_reduction <add>, %93, %cst_34 [1, 2] : vector<1x8x1xf32> to vector<1xf32>
    %95 = vector.shape_cast %94 : vector<1xf32> to vector<1x1x1xf32>
    %96 = vector.extract %95[0, 0, 0] : f32 from vector<1x1x1xf32>
    %97 = arith.addf %85, %96 : f32
    %cst_35 = arith.constant 2.560000e+02 : f32
    %98 = arith.divf %97, %cst_35 : f32
    %c0_36 = arith.constant 0 : index
    %99 = memref.load %arg6[%c0_36] : memref<2xf32, #tpu.memory_space<smem>>
    memref.store %39, %arg6[%c0_36] : memref<2xf32, #tpu.memory_space<smem>>
    %c1 = arith.constant 1 : index
    %100 = memref.load %arg6[%c1] : memref<2xf32, #tpu.memory_space<smem>>
    memref.store %98, %arg6[%c1] : memref<2xf32, #tpu.memory_space<smem>>
    return
  }
}

</mosaic_0001>

<llo_original>
// kernel: hakes_index_forward.1
$region0: #{hakes_index_forward.1}
  #allocation0 [shape = 'u32[]', space=smem, size = 0x4, offset = 0x4, fixed_abs, tag = 'smem constant byte address 0x4 - core index']
  #allocation1 [shape = 'u32[144,128]{1,0:T(1,128)}', space=vmem, size = 0x12000, scoped, tag = 'internal scratch']
  %s0 = inlined_call_operand.vmem [shape: f32[16,32], index: 0, kind: input, shape index: {}]
  %s1 = inlined_call_operand.vmem [shape: f32[32,32], index: 1, kind: input, shape index: {}]
  %s2 = inlined_call_operand.vmem [shape: f32[1,32], index: 2, kind: input, shape index: {}]
  %s3 = inlined_call_operand.vmem [shape: f32[32,64], index: 3, kind: input, shape index: {}]
  %s4 = inlined_call_operand.vmem [shape: f32[1,64], index: 4, kind: input, shape index: {}]
  %s5 = inlined_call_operand.vmem [shape: f32[32,4], index: 5, kind: input, shape index: {}]
  %s6 = inlined_call_operand.vmem [shape: f32[2], index: 6, kind: output, shape index: {}]
  %s7 = sld [smem:[#allocation0]]
  $region34: #{hakes_index_forward.1} parent=0
    _
  %s9 = ssub.s32 1, %s7
  %s10 = scalar_select 0, %s9, %s7
  $region1: #{hakes_index_forward.1} parent=0
    #allocation2 [shape = 'u8[512]{0}', space=smem, size = 0x200, scoped, tag = 'output window, operand 0, single buffered']
    #allocation3 [shape = 's32[1]{0}', space=sflag, size = 0x4, scoped, tag = 'scoped memory for hakes_index_forward.1']
    %11 = vsyncpa [#allocation3], 0
    // Predicated region
    $region2: #{hakes_index_forward.1} parent=1 // pred_check
      _
    $region3: #{hakes_index_forward.1} parent=1 // pred_check_branch
      %13 = sbr.rel (0) target = $region5
    $region4: #{hakes_index_forward.1} parent=1 // pred_region
      _
    $region5: #{hakes_index_forward.1} parent=1 // pred_fallthru
      _
    // Predicated region
    $region6: #{hakes_index_forward.1} parent=1 // pred_check
      _
    $region7: #{hakes_index_forward.1} parent=1 // pred_check_branch
      %15 = sbr.rel (0) target = $region9
    $region8: #{hakes_index_forward.1} parent=1 // pred_region
      _
    $region9: #{hakes_index_forward.1} parent=1 // pred_fallthru
      _
    // Predicated region
    $region10: #{hakes_index_forward.1} parent=1 // pred_check
      _
    $region11: #{hakes_index_forward.1} parent=1 // pred_check_branch
      %17 = sbr.rel (0) target = $region13
    $region12: #{hakes_index_forward.1} parent=1 // pred_region
      _
    $region13: #{hakes_index_forward.1} parent=1 // pred_fallthru
      _
    // Predicated region
    $region14: #{hakes_index_forward.1} parent=1 // pred_check
      _
    $region15: #{hakes_index_forward.1} parent=1 // pred_check_branch
      %19 = sbr.rel (0) target = $region17
    $region16: #{hakes_index_forward.1} parent=1 // pred_region
      _
    $region17: #{hakes_index_forward.1} parent=1 // pred_fallthru
      _
    // Predicated region
    $region18: #{hakes_index_forward.1} parent=1 // pred_check
      _
    $region19: #{hakes_index_forward.1} parent=1 // pred_check_branch
      %21 = sbr.rel (0) target = $region21
    $region20: #{hakes_index_forward.1} parent=1 // pred_region
      _
    $region21: #{hakes_index_forward.1} parent=1 // pred_fallthru
      _
    // Predicated region
    $region22: #{hakes_index_forward.1} parent=1 // pred_check
      _
    $region23: #{hakes_index_forward.1} parent=1 // pred_check_branch
      %23 = sbr.rel (0) target = $region25
    $region24: #{hakes_index_forward.1} parent=1 // pred_region
      _
    $region25: #{hakes_index_forward.1} parent=1 // pred_fallthru
      _
    %v24 = vld [vmem:[%s0] sm:$0xff]
    %v25 = vld [vmem:[%s0 + $0x8] sm:$0xff]
    %v26 = vld [vmem:[%s1] sm:$0xff]
    %v27 = vld [vmem:[%s1 + $0x8] sm:$0xff]
    %v28 = vld [vmem:[%s1 + $0x10] sm:$0xff]
    %v29 = vld [vmem:[%s1 + $0x18] sm:$0xff]
    %v30 = vld [vmem:[%s2] sm:$0x1]
    %v32 = vlaneseq
    %v33 = vshrl.u32 %v32, 7
    %v34 = vsub.s32 0, %v33
    %v35 = vrot.slane %v30, %v34
    %vm37 = vcmask 261120
    %v39 = vsel %vm37, %v24, 0
    %v42 = vsel %vm37, %v25, 0
    %44 = vmatprep.subr.mxu0 0.0
    %45 = vmatpush1.msra.mxu0 %v26
    %46 = vmatprep.subr.mxu0 0.0
    %47 = vmatpush1.msra.mxu0 %v27
    %48 = vmatprep.subr.mxu0 0.0
    %49 = vmatpush1.msra.mxu0 %v28
    %50 = vmatprep.subr.mxu0 0.0
    %51 = vmatpush1.msra.mxu0 %v29
    %52 = vmatprep.subr.mxu0 0.0
    %53 = vmatpush1.msra.mxu0 0.0
    %54 = vmatprep.subr.mxu0 0.0
    %55 = vmatpush1.msra.mxu0 0.0
    %56 = vmatprep.subr.mxu0 0.0
    %57 = vmatpush1.msra.mxu0 0.0
    %58 = vmatprep.subr.mxu0 0.0
    %59 = vmatpush1.msra.mxu0 0.0
    %60 = vmatprep.subr.mxu0 0.0
    %61 = vmatpush1.msra.mxu0 0.0
    %62 = vmatprep.subr.mxu0 0.0
    %63 = vmatpush1.msra.mxu0 0.0
    %64 = vmatprep.subr.mxu0 0.0
    %65 = vmatpush1.msra.mxu0 0.0
    %66 = vmatprep.subr.mxu0 0.0
    %67 = vmatpush1.msra.mxu0 0.0
    %68 = vmatprep.subr.mxu0 0.0
    %69 = vmatpush1.msra.mxu0 0.0
    %70 = vmatprep.subr.mxu0 0.0
    %71 = vmatpush1.msra.mxu0 0.0
    %72 = vmatprep.subr.mxu0 0.0
    %73 = vmatpush1.msra.mxu0 0.0
    %74 = vmatprep.subr.mxu0 0.0
    %75 = vmatpush1.msra.mxu0 0.0
    %76 = vmatprep.subr.mxu0 0.0
    %77 = vmatpush1.msra.mxu0 0.0
    %78 = vmatprep.subr.mxu0 0.0
    %79 = vmatpush1.msra.mxu0 0.0
    %80 = vmatprep.subr.mxu0 0.0
    %81 = vmatpush1.msra.mxu0 0.0
    %82 = vmatprep.subr.mxu0 0.0
    %83 = vmatpush1.msra.mxu0 0.0
    %84 = vmatprep.subr.mxu0 0.0
    %85 = vmatpush1.msra.mxu0 0.0
    %86 = vmatprep.subr.mxu0 0.0
    %87 = vmatpush1.msra.mxu0 0.0
    %88 = vmatprep.subr.mxu0 0.0
    %89 = vmatpush1.msra.mxu0 0.0
    %90 = vmatprep.subr.mxu0 0.0
    %91 = vmatpush1.msra.mxu0 0.0
    %92 = vmatprep.subr.mxu0 0.0
    %93 = vmatpush1.msra.mxu0 0.0
    %94 = vmatprep.subr.mxu0 0.0
    %95 = vmatpush1.msra.mxu0 0.0
    %96 = vmatprep.subr.mxu0 0.0
    %97 = vmatpush1.msra.mxu0 0.0
    %98 = vmatprep.subr.mxu0 0.0
    %99 = vmatpush1.msra.mxu0 0.0
    %100 = vmatprep.subr.mxu0 0.0
    %101 = vmatpush1.msra.mxu0 0.0
    %102 = vmatprep.subr.mxu0 0.0
    %103 = vmatpush1.msra.mxu0 0.0
    %104 = vmatprep.subr.mxu0 0.0
    %105 = vmatpush1.msra.mxu0 0.0
    %106 = vmatprep.subr.mxu0 0.0
    %107 = vmatpush1.msra.mxu0 0.0
    %108 = vmatprep.mubr.f32.mxu0 0.0
    %109 = vmatmul.mubr.f32.gmra.mrb[0].mxu0 %v39
    %v110 = vpop.f32.mrb[0].mxu0
    %v111 = vadd.f32 %v35, %v110
    %v112 = vpop.f32.mrb[0].mxu0
    %113 = vmatprep.mubr.f32.mxu0 0.0
    %114 = vmatmul.mubr.f32.gmra.mrb[0].mxu0 %v42
    %v115 = vpop.f32.mrb[0].mxu0
    %v116 = vadd.f32 %v35, %v115
    %v117 = vpop.f32.mrb[0].mxu0
    %118 = vdwg.mxu0
    %119 = vmatprep.subr.mxu0 0.0
    %120 = vmatpush1.xpose.msra.mxu0 %v42
    %121 = vmatprep.subr.mxu0 0.0
    %122 = vmatpush1.xpose.msra.mxu0 0.0
    %123 = vmatprep.subr.mxu0 0.0
    %124 = vmatpush1.xpose.msra.mxu0 0.0
    %125 = vmatprep.subr.mxu0 0.0
    %126 = vmatpush1.xpose.msra.mxu0 0.0
    %127 = vmatprep.subr.mxu0 0.0
    %128 = vmatpush1.xpose.msra.mxu0 0.0
    %129 = vmatprep.subr.mxu0 0.0
    %130 = vmatpush1.xpose.msra.mxu0 0.0
    %131 = vmatprep.subr.mxu0 0.0
    %132 = vmatpush1.xpose.msra.mxu0 0.0
    %133 = vmatprep.subr.mxu0 0.0
    %134 = vmatpush1.xpose.msra.mxu0 0.0
    %135 = vmatprep.subr.mxu0 0.0
    %136 = vmatpush1.xpose.msra.mxu0 0.0
    %137 = vmatprep.subr.mxu0 0.0
    %138 = vmatpush1.xpose.msra.mxu0 0.0
    %139 = vmatprep.subr.mxu0 0.0
    %140 = vmatpush1.xpose.msra.mxu0 0.0
    %141 = vmatprep.subr.mxu0 0.0
    %142 = vmatpush1.xpose.msra.mxu0 0.0
    %143 = vmatprep.subr.mxu0 0.0
    %144 = vmatpush1.xpose.msra.mxu0 0.0
    %145 = vmatprep.subr.mxu0 0.0
    %146 = vmatpush1.xpose.msra.mxu0 0.0
    %147 = vmatprep.subr.mxu0 0.0
    %148 = vmatpush1.xpose.msra.mxu0 0.0
    %149 = vmatprep.subr.mxu0 0.0
    %150 = vmatpush1.xpose.msra.mxu0 0.0
    %151 = vmatprep.subr.mxu0 0.0
    %152 = vmatpush1.xpose.msra.mxu0 0.0
    %153 = vmatprep.subr.mxu0 0.0
    %154 = vmatpush1.xpose.msra.mxu0 0.0
    %155 = vmatprep.subr.mxu0 0.0
    %156 = vmatpush1.xpose.msra.mxu0 0.0
    %157 = vmatprep.subr.mxu0 0.0
    %158 = vmatpush1.xpose.msra.mxu0 0.0
    %159 = vmatprep.subr.mxu0 0.0
    %160 = vmatpush1.xpose.msra.mxu0 0.0
    %161 = vmatprep.subr.mxu0 0.0
    %162 = vmatpush1.xpose.msra.mxu0 0.0
    %163 = vmatprep.subr.mxu0 0.0
    %164 = vmatpush1.xpose.msra.mxu0 0.0
    %165 = vmatprep.subr.mxu0 0.0
    %166 = vmatpush1.xpose.msra.mxu0 0.0
    %167 = vmatprep.subr.mxu0 0.0
    %168 = vmatpush1.xpose.msra.mxu0 0.0
    %169 = vmatprep.subr.mxu0 0.0
    %170 = vmatpush1.xpose.msra.mxu0 0.0
    %171 = vmatprep.subr.mxu0 0.0
    %172 = vmatpush1.xpose.msra.mxu0 0.0
    %173 = vmatprep.subr.mxu0 0.0
    %174 = vmatpush1.xpose.msra.mxu0 0.0
    %175 = vmatprep.subr.mxu0 0.0
    %176 = vmatpush1.xpose.msra.mxu0 0.0
    %177 = vmatprep.subr.mxu0 0.0
    %178 = vmatpush1.xpose.msra.mxu0 0.0
    %179 = vmatprep.subr.mxu0 0.0
    %180 = vmatpush1.xpose.msra.mxu0 0.0
    %181 = vmatprep.subr.mxu0 0.0
    %182 = vmatpush1.xpose.msra.mxu0 0.0
    %183 = vmatprep.mubr.f32.mxu0 0.0
    %184 = vmatmul.mubr.f32.gmra.mrb[0].mxu0 %v39
    %v185 = vpop.f32.mrb[0].mxu0
    %v186 = vadd.f32 0.0, %v185
    %v187 = vpop.f32.mrb[0].mxu0
    %188 = vdwg.mxu0
    %v190 = vsel %vm37, %v111, 0
    %v193 = vsel %vm37, %v116, 0
    %195 = vmatprep.subr.mxu0 0.0
    %196 = vmatpush1.xpose.msra.mxu0 %v193
    %197 = vmatprep.subr.mxu0 0.0
    %198 = vmatpush1.xpose.msra.mxu0 0.0
    %199 = vmatprep.subr.mxu0 0.0
    %200 = vmatpush1.xpose.msra.mxu0 0.0
    %201 = vmatprep.subr.mxu0 0.0
    %202 = vmatpush1.xpose.msra.mxu0 0.0
    %203 = vmatprep.subr.mxu0 0.0
    %204 = vmatpush1.xpose.msra.mxu0 0.0
    %205 = vmatprep.subr.mxu0 0.0
    %206 = vmatpush1.xpose.msra.mxu0 0.0
    %207 = vmatprep.subr.mxu0 0.0
    %208 = vmatpush1.xpose.msra.mxu0 0.0
    %209 = vmatprep.subr.mxu0 0.0
    %210 = vmatpush1.xpose.msra.mxu0 0.0
    %211 = vmatprep.subr.mxu0 0.0
    %212 = vmatpush1.xpose.msra.mxu0 0.0
    %213 = vmatprep.subr.mxu0 0.0
    %214 = vmatpush1.xpose.msra.mxu0 0.0
    %215 = vmatprep.subr.mxu0 0.0
    %216 = vmatpush1.xpose.msra.mxu0 0.0
    %217 = vmatprep.subr.mxu0 0.0
    %218 = vmatpush1.xpose.msra.mxu0 0.0
    %219 = vmatprep.subr.mxu0 0.0
    %220 = vmatpush1.xpose.msra.mxu0 0.0
    %221 = vmatprep.subr.mxu0 0.0
    %222 = vmatpush1.xpose.msra.mxu0 0.0
    %223 = vmatprep.subr.mxu0 0.0
    %224 = vmatpush1.xpose.msra.mxu0 0.0
    %225 = vmatprep.subr.mxu0 0.0
    %226 = vmatpush1.xpose.msra.mxu0 0.0
    %227 = vmatprep.subr.mxu0 0.0
    %228 = vmatpush1.xpose.msra.mxu0 0.0
    %229 = vmatprep.subr.mxu0 0.0
    %230 = vmatpush1.xpose.msra.mxu0 0.0
    %231 = vmatprep.subr.mxu0 0.0
    %232 = vmatpush1.xpose.msra.mxu0 0.0
    %233 = vmatprep.subr.mxu0 0.0
    %234 = vmatpush1.xpose.msra.mxu0 0.0
    %235 = vmatprep.subr.mxu0 0.0
    %236 = vmatpush1.xpose.msra.mxu0 0.0
    %237 = vmatprep.subr.mxu0 0.0
    %238 = vmatpush1.xpose.msra.mxu0 0.0
    %239 = vmatprep.subr.mxu0 0.0
    %240 = vmatpush1.xpose.msra.mxu0 0.0
    %241 = vmatprep.subr.mxu0 0.0
    %242 = vmatpush1.xpose.msra.mxu0 0.0
    %243 = vmatprep.subr.mxu0 0.0
    %244 = vmatpush1.xpose.msra.mxu0 0.0
    %245 = vmatprep.subr.mxu0 0.0
    %246 = vmatpush1.xpose.msra.mxu0 0.0
    %247 = vmatprep.subr.mxu0 0.0
    %248 = vmatpush1.xpose.msra.mxu0 0.0
    %249 = vmatprep.subr.mxu0 0.0
    %250 = vmatpush1.xpose.msra.mxu0 0.0
    %251 = vmatprep.subr.mxu0 0.0
    %252 = vmatpush1.xpose.msra.mxu0 0.0
    %253 = vmatprep.subr.mxu0 0.0
    %254 = vmatpush1.xpose.msra.mxu0 0.0
    %255 = vmatprep.subr.mxu0 0.0
    %256 = vmatpush1.xpose.msra.mxu0 0.0
    %257 = vmatprep.subr.mxu0 0.0
    %258 = vmatpush1.xpose.msra.mxu0 0.0
    %259 = vmatprep.mubr.f32.mxu0 0.0
    %260 = vmatmul.mubr.f32.gmra.mrb[0].mxu0 %v190
    %v261 = vpop.f32.mrb[0].mxu0
    %v262 = vadd.f32 0.0, %v261
    %v263 = vpop.f32.mrb[0].mxu0
    %264 = vdwg.mxu0
    %vm265 = vcmask 64512
    %v266 = vsel %vm265, %v186, -inf
    %267 = vmax.xlane.f32.xlu0 %v266
    %v268 = vpop.xlane.xlu0 %267
    %v269 = vsub.f32 %v186, %v268
    %v270 = vmul.f32 %v269, 1.442695
    %v271 = vpow.pop %v270
    %v272 = vsel %vm265, %v271, 0.0
    %273 = vadd.xlane.f32.xlu0 %v272
    %v274 = vpop.xlane.xlu0 %273
    %v275 = vlog2.pop %v274
    %v276 = vmul.f32 %v275, 0.6931472
    %v277 = vsub.f32 %v269, %v276
    %v278 = vmul.f32 %v277, 1.442695
    %v279 = vpow.pop %v278
    %v280 = vsel %vm265, %v262, -inf
    %281 = vmax.xlane.f32.xlu0 %v280
    %v282 = vpop.xlane.xlu0 %281
    %v283 = vsub.f32 %v262, %v282
    %v284 = vmul.f32 %v283, 1.442695
    %v285 = vpow.pop %v284
    %v286 = vsel %vm265, %v285, 0.0
    %287 = vadd.xlane.f32.xlu0 %v286
    %v288 = vpop.xlane.xlu0 %287
    %v289 = vlog2.pop %v288
    %v290 = vmul.f32 %v289, 0.6931472
    %v291 = vsub.f32 %v283, %v290
    %v292 = vsub.f32 %v277, %v291
    %v293 = vmul.f32 %v279, %v292
    %v294 = vsel %vm265, %v293, 0.0
    %295 = vadd.xlane.f32.xlu0 %v294
    %v296 = vpop.xlane.xlu0 %295
    %v297 = vrot.slane %v296, 4
    %v298 = vadd.f32 %v296, %v297
    %v299 = vrot.slane %v298, 2
    %v300 = vadd.f32 %v298, %v299
    %v301 = vrot.slane %v300, 1
    %v302 = vadd.f32 %v300, %v301
    %s303 = vtos %v302
    %v304 = vrcp.pop 8.0
    %s305 = vtos %v304
    %s306 = smul.f32 %s303, %s305
    %v307 = vmul.f32 %v116, %v116
    %v308 = vld [vmem:[%s5] sm:$0xff]
    %v309 = vld [vmem:[%s5 + $0x8] sm:$0xff]
    %v310 = vld [vmem:[%s5 + $0x10] sm:$0xff]
    %v311 = vld [vmem:[%s5 + $0x18] sm:$0xff]
    %v313 = vsel %vm37, %v307, 0
    %315 = vmatprep.subr.mxu0 0.0
    %316 = vmatpush1.msra.mxu0 %v308
    %317 = vmatprep.subr.mxu0 0.0
    %318 = vmatpush1.msra.mxu0 %v309
    %319 = vmatprep.subr.mxu0 0.0
    %320 = vmatpush1.msra.mxu0 %v310
    %321 = vmatprep.subr.mxu0 0.0
    %322 = vmatpush1.msra.mxu0 %v311
    %323 = vmatprep.subr.mxu0 0.0
    %324 = vmatpush1.msra.mxu0 0.0
    %325 = vmatprep.subr.mxu0 0.0
    %326 = vmatpush1.msra.mxu0 0.0
    %327 = vmatprep.subr.mxu0 0.0
    %328 = vmatpush1.msra.mxu0 0.0
    %329 = vmatprep.subr.mxu0 0.0
    %330 = vmatpush1.msra.mxu0 0.0
    %331 = vmatprep.subr.mxu0 0.0
    %332 = vmatpush1.msra.mxu0 0.0
    %333 = vmatprep.subr.mxu0 0.0
    %334 = vmatpush1.msra.mxu0 0.0
    %335 = vmatprep.subr.mxu0 0.0
    %336 = vmatpush1.msra.mxu0 0.0
    %337 = vmatprep.subr.mxu0 0.0
    %338 = vmatpush1.msra.mxu0 0.0
    %339 = vmatprep.subr.mxu0 0.0
    %340 = vmatpush1.msra.mxu0 0.0
    %341 = vmatprep.subr.mxu0 0.0
    %342 = vmatpush1.msra.mxu0 0.0
    %343 = vmatprep.subr.mxu0 0.0
    %344 = vmatpush1.msra.mxu0 0.0
    %345 = vmatprep.subr.mxu0 0.0
    %346 = vmatpush1.msra.mxu0 0.0
    %347 = vmatprep.subr.mxu0 0.0
    %348 = vmatpush1.msra.mxu0 0.0
    %349 = vmatprep.subr.mxu0 0.0
    %350 = vmatpush1.msra.mxu0 0.0
    %351 = vmatprep.subr.mxu0 0.0
    %352 = vmatpush1.msra.mxu0 0.0
    %353 = vmatprep.subr.mxu0 0.0
    %354 = vmatpush1.msra.mxu0 0.0
    %355 = vmatprep.subr.mxu0 0.0
    %356 = vmatpush1.msra.mxu0 0.0
    %357 = vmatprep.subr.mxu0 0.0
    %358 = vmatpush1.msra.mxu0 0.0
    %359 = vmatprep.subr.mxu0 0.0
    %360 = vmatpush1.msra.mxu0 0.0
    %361 = vmatprep.subr.mxu0 0.0
    %362 = vmatpush1.msra.mxu0 0.0
    %363 = vmatprep.subr.mxu0 0.0
    %364 = vmatpush1.msra.mxu0 0.0
    %365 = vmatprep.subr.mxu0 0.0
    %366 = vmatpush1.msra.mxu0 0.0
    %367 = vmatprep.subr.mxu0 0.0
    %368 = vmatpush1.msra.mxu0 0.0
    %369 = vmatprep.subr.mxu0 0.0
    %370 = vmatpush1.msra.mxu0 0.0
    %371 = vmatprep.subr.mxu0 0.0
    %372 = vmatpush1.msra.mxu0 0.0
    %373 = vmatprep.subr.mxu0 0.0
    %374 = vmatpush1.msra.mxu0 0.0
    %375 = vmatprep.subr.mxu0 0.0
    %376 = vmatpush1.msra.mxu0 0.0
    %377 = vmatprep.subr.mxu0 0.0
    %378 = vmatpush1.msra.mxu0 0.0
    %379 = vmatprep.mubr.f32.mxu0 0.0
    %380 = vmatmul.mubr.f32.gmra.mrb[0].mxu0 %v313
    %v381 = vpop.f32.mrb[0].mxu0
    %v382 = vadd.f32 0.0, %v381
    %v383 = vpop.f32.mrb[0].mxu0
    %384 = vdwg.mxu0
    %v385 = vld [vmem:[%s3] sm:$0xff]
    %v386 = vld [vmem:[%s3 + $0x8] sm:$0xff]
    %v387 = vld [vmem:[%s3 + $0x10] sm:$0xff]
    %v388 = vld [vmem:[%s3 + $0x18] sm:$0xff]
    %389 = vmatprep.subr.mxu0 0.0
    %390 = vmatpush1.msra.mxu0 %v385
    %391 = vmatprep.subr.mxu0 0.0
    %392 = vmatpush1.msra.mxu0 %v386
    %393 = vmatprep.subr.mxu0 0.0
    %394 = vmatpush1.msra.mxu0 %v387
    %395 = vmatprep.subr.mxu0 0.0
    %396 = vmatpush1.msra.mxu0 %v388
    %397 = vmatprep.subr.mxu0 0.0
    %398 = vmatpush1.msra.mxu0 0.0
    %399 = vmatprep.subr.mxu0 0.0
    %400 = vmatpush1.msra.mxu0 0.0
    %401 = vmatprep.subr.mxu0 0.0
    %402 = vmatpush1.msra.mxu0 0.0
    %403 = vmatprep.subr.mxu0 0.0
    %404 = vmatpush1.msra.mxu0 0.0
    %405 = vmatprep.subr.mxu0 0.0
    %406 = vmatpush1.msra.mxu0 0.0
    %407 = vmatprep.subr.mxu0 0.0
    %408 = vmatpush1.msra.mxu0 0.0
    %409 = vmatprep.subr.mxu0 0.0
    %410 = vmatpush1.msra.mxu0 0.0
    %411 = vmatprep.subr.mxu0 0.0
    %412 = vmatpush1.msra.mxu0 0.0
    %413 = vmatprep.subr.mxu0 0.0
    %414 = vmatpush1.msra.mxu0 0.0
    %415 = vmatprep.subr.mxu0 0.0
    %416 = vmatpush1.msra.mxu0 0.0
    %417 = vmatprep.subr.mxu0 0.0
    %418 = vmatpush1.msra.mxu0 0.0
    %419 = vmatprep.subr.mxu0 0.0
    %420 = vmatpush1.msra.mxu0 0.0
    %421 = vmatprep.subr.mxu0 0.0
    %422 = vmatpush1.msra.mxu0 0.0
    %423 = vmatprep.subr.mxu0 0.0
    %424 = vmatpush1.msra.mxu0 0.0
    %425 = vmatprep.subr.mxu0 0.0
    %426 = vmatpush1.msra.mxu0 0.0
    %427 = vmatprep.subr.mxu0 0.0
    %428 = vmatpush1.msra.mxu0 0.0
    %429 = vmatprep.subr.mxu0 0.0
    %430 = vmatpush1.msra.mxu0 0.0
    %431 = vmatprep.subr.mxu0 0.0
    %432 = vmatpush1.msra.mxu0 0.0
    %433 = vmatprep.subr.mxu0 0.0
    %434 = vmatpush1.msra.mxu0 0.0
    %435 = vmatprep.subr.mxu0 0.0
    %436 = vmatpush1.msra.mxu0 0.0
    %437 = vmatprep.subr.mxu0 0.0
    %438 = vmatpush1.msra.mxu0 0.0
    %439 = vmatprep.subr.mxu0 0.0
    %440 = vmatpush1.msra.mxu0 0.0
    %441 = vmatprep.subr.mxu0 0.0
    %442 = vmatpush1.msra.mxu0 0.0
    %443 = vmatprep.subr.mxu0 0.0
    %444 = vmatpush1.msra.mxu0 0.0
    %445 = vmatprep.subr.mxu0 0.0
    %446 = vmatpush1.msra.mxu0 0.0
    %447 = vmatprep.subr.mxu0 0.0
    %448 = vmatpush1.msra.mxu0 0.0
    %449 = vmatprep.subr.mxu0 0.0
    %450 = vmatpush1.msra.mxu0 0.0
    %451 = vmatprep.subr.mxu0 0.0
    %452 = vmatpush1.msra.mxu0 0.0
    %453 = vmatprep.mubr.f32.mxu0 0.0
    %454 = vmatmul.mubr.f32.gmra.mrb[0].mxu0 %v193
    %v455 = vpop.f32.mrb[0].mxu0
    %v456 = vadd.f32 0.0, %v455
    %v457 = vpop.f32.mrb[0].mxu0
    %458 = vdwg.mxu0
    %v459 = vld [vmem:[%s4] sm:$0x1]
    %v460 = vmul.f32 %v456, 2.0
    %v462 = vlaneseq
    %v463 = vshrl.u32 %v462, 7
    %v464 = vsub.s32 0, %v463
    %v465 = vrot.slane %v459, %v464
    %v467 = vsub.f32 %v465, %v460
    %vm468 = vcmask 130048
    %v469 = vsel %vm468, %v467, inf
    %470 = vmin.xlane.f32.xlu0 %v469
    %v471 = vpop.xlane.xlu0 %470
    %v472 = vadd.f32 %v382, %v471
    %v473 = vmax.f32 %v472, 0.0
    %vm474 = vcmask 7168
    %v475 = vsel %vm474, %v473, 0.0
    %476 = vadd.xlane.f32.xlu0 %v475
    %v477 = vpop.xlane.xlu0 %476
    %v478 = vrot.slane %v477, 4
    %v479 = vadd.f32 %v477, %v478
    %v480 = vrot.slane %v479, 2
    %v481 = vadd.f32 %v479, %v480
    %v482 = vrot.slane %v481, 1
    %v483 = vadd.f32 %v481, %v482
    %s484 = vtos %v483
    %s485 = sadd.f32 %s484, 0.0
    %vm486 = vcmask 261248
    %v487 = vsel %vm486, %v467, inf
    %488 = vmin.xlane.f32.xlu0 %v487
    %v489 = vpop.xlane.xlu0 %488
    %v490 = vadd.f32 %v382, %v489
    %v491 = vmax.f32 %v490, 0.0
    %493 = vrot.lane.b32.xlu0 %v491, 127
    %v494 = vpop.permute.xlu0 %493
    %v496 = vsel %vm474, %v494, 0.0
    %497 = vadd.xlane.f32.xlu0 %v496
    %v498 = vpop.xlane.xlu0 %497
    %v499 = vrot.slane %v498, 4
    %v500 = vadd.f32 %v498, %v499
    %v501 = vrot.slane %v500, 2
    %v502 = vadd.f32 %v500, %v501
    %v503 = vrot.slane %v502, 1
    %v504 = vadd.f32 %v502, %v503
    %s505 = vtos %v504
    %s506 = sadd.f32 %s485, %s505
    %vm507 = vcmask 392448
    %v508 = vsel %vm507, %v467, inf
    %509 = vmin.xlane.f32.xlu0 %v508
    %v510 = vpop.xlane.xlu0 %509
    %v511 = vadd.f32 %v382, %v510
    %v512 = vmax.f32 %v511, 0.0
    %514 = vrot.lane.b32.xlu0 %v512, 126
    %v515 = vpop.permute.xlu0 %514
    %v517 = vsel %vm474, %v515, 0.0
    %518 = vadd.xlane.f32.xlu0 %v517
    %v519 = vpop.xlane.xlu0 %518
    %v520 = vrot.slane %v519, 4
    %v521 = vadd.f32 %v519, %v520
    %v522 = vrot.slane %v521, 2
    %v523 = vadd.f32 %v521, %v522
    %v524 = vrot.slane %v523, 1
    %v525 = vadd.f32 %v523, %v524
    %s526 = vtos %v525
    %s527 = sadd.f32 %s506, %s526
    %vm528 = vcmask 523648
    %v529 = vsel %vm528, %v467, inf
    %530 = vmin.xlane.f32.xlu0 %v529
    %v531 = vpop.xlane.xlu0 %530
    %v532 = vadd.f32 %v382, %v531
    %v533 = vmax.f32 %v532, 0.0
    %535 = vrot.lane.b32.xlu0 %v533, 125
    %v536 = vpop.permute.xlu0 %535
    %v538 = vsel %vm474, %v536, 0.0
    %539 = vadd.xlane.f32.xlu0 %v538
    %v540 = vpop.xlane.xlu0 %539
    %v541 = vrot.slane %v540, 4
    %v542 = vadd.f32 %v540, %v541
    %v543 = vrot.slane %v542, 2
    %v544 = vadd.f32 %v542, %v543
    %v545 = vrot.slane %v544, 1
    %v546 = vadd.f32 %v544, %v545
    %s547 = vtos %v546
    %s548 = sadd.f32 %s527, %s547
    %v549 = vrcp.pop 256.0
    %s550 = vtos %v549
    %s551 = smul.f32 %s548, %s550
    %s552 = scalar_lea.smem [#allocation2], 0
    %553 = sst [smem:[%s552]] %s306
    %s554 = scalar_lea.smem [#allocation2], 1
    %555 = sst [smem:[%s554]] %s551
    // Predicated region
    $region26: #{hakes_index_forward.1} parent=1 // pred_check
      _
    $region27: #{hakes_index_forward.1} parent=1 // pred_check_branch
      %557 = sbr.rel (0) target = $region29
    $region28: #{hakes_index_forward.1} parent=1 // pred_region
      %s559 = ssub.s32 16, 16
      %560 = vsyncadd [#allocation3], %s559
      %s562 = sshll.u32 %s6, 4
      %s563 = int_to_ptr.vmem [resolvable:$true] %s562
      %565 = dma.smem_to_vmem [#allocation2], 16, %s563, [#allocation3]
    $region29: #{hakes_index_forward.1} parent=1 // pred_fallthru
      _
    // Predicated region
    $region30: #{hakes_index_forward.1} parent=1 // pred_check
      _
    $region31: #{hakes_index_forward.1} parent=1 // pred_check_branch
      %567 = sbr.rel (0) target = $region33
    $region32: #{hakes_index_forward.1} parent=1 // pred_region
      %568 = dma.done [#allocation3], 16
    $region33: #{hakes_index_forward.1} parent=1 // pred_fallthru
      _
    %569 = sfence
    %570 = vsyncpa [#allocation3], 1

</llo_original>
